<compile_context>
chip_gen: v6e
topology: v6e:2x2x1
jax: 0.10.0
libtpu: 0.0.40
codegen_flags: <defaults>
</compile_context>

<pallas_src>
import functools

import jax
import jax.numpy as jnp
from jax.experimental import pallas as pl
from jax.experimental.pallas import tpu as pltpu

_EPS = 1e-8  # nn.CosineSimilarity default eps


def _round_up(x, m):
    return (x + m - 1) // m * m


def _nca_hn_loss_kernel(a_ref, p_ref, n_ref, out_ref, *, batch):
    tb = a_ref.shape[0]

    # Row-wise dot products over the feature (lane) axis. The f32 upcast is
    # fused into each product+reduce expression (never bound to reusable named
    # f32 arrays) so full (tb, D) f32 copies of a/p/n don't have to be stored
    # back to VMEM through the single vst slot when inputs are sub-32-bit.
    def rowdot(x_ref, y_ref):
        x = x_ref[...].astype(jnp.float32)
        y = y_ref[...].astype(jnp.float32)
        return jnp.sum(x * y, axis=-1, keepdims=True)   # (tb, 1)

    ap = rowdot(a_ref, p_ref)
    an = rowdot(a_ref, n_ref)
    aa = rowdot(a_ref, a_ref)
    pp = rowdot(p_ref, p_ref)
    nn = rowdot(n_ref, n_ref)

    # cos = x.y / max(||x||*||y||, eps) == x.y * rsqrt(max(||x||^2*||y||^2, eps^2))
    eps2 = jnp.float32(_EPS * _EPS)
    p_cos = ap * jax.lax.rsqrt(jnp.maximum(aa * pp, eps2))
    n_cos = an * jax.lax.rsqrt(jnp.maximum(aa * nn, eps2))

    # -log(exp(p)/(exp(p)+exp(n))) == log1p(exp(n - p))   (softplus; arg <= 2
    # on the branch that is actually taken, so no overflow on valid rows)
    normal_loss = jnp.log1p(jnp.exp(n_cos - p_cos))
    per_row = jnp.where(n_cos > p_cos, n_cos, normal_loss)   # (tb, 1)

    # Mask rows past the true batch (only present in the ragged last block;
    # static check). Applied AFTER the per-row compute so any NaN/Inf coming
    # from the unspecified out-of-bounds rows is discarded by the select.
    if batch % tb:
        row = jax.lax.broadcasted_iota(jnp.int32, (tb, 1), 0)
        valid = (pl.program_id(0) * tb + row) < batch
        per_row = jnp.where(valid, per_row, 0.0)

    # One lane-dense (8,128) partial-sum slab per grid step -> no cross-step
    # carry, so the grid axis stays "parallel". Wrapper reads [i, 0, 0].
    out_ref[...] = jnp.broadcast_to(jnp.sum(per_row), out_ref.shape)


def _vmem_budget_bytes():
    """Returns (working_set_bytes, scoped_vmem_limit_bytes) for this chip."""
    cap = None
    try:
        cap = int(getattr(pltpu.get_tpu_info(), "vmem_capacity_bytes", 0)) or None
    except Exception:
        cap = None
    if cap is None or cap <= 64 * 1024 * 1024:
        # v7x-class (64 MiB VMEM per TensorCore) or unknown chip: conservative.
        return 24 * 1024 * 1024, 40 * 1024 * 1024
    # v5e / v6e: 128 MiB physical VMEM and slower HBM -> bigger tiles are free.
    return 48 * 1024 * 1024, 64 * 1024 * 1024


def nca_hn_loss(a_embed, p_embed, n_embed, *, tb=None):
    """Pallas implementation of NcaHnLoss.forward. Inputs: (B, D) arrays."""
    B, D = a_embed.shape
    itemsize = jnp.dtype(a_embed.dtype).itemsize
    working_set, vmem_limit = _vmem_budget_bytes()

    if tb is None:
        # Byte-based tile cap: 3 inputs x 2 pipeline buffers in native dtype,
        # plus allowance for f32 epilogue temporaries. No fixed row cap, so
        # small-D shapes still stream multi-MiB slabs per step and amortize
        # the ~0.35 us per-grid-step overhead.
        bytes_per_row = 3 * 2 * D * itemsize + 3 * D * 4
        rows_vmem = max(8, working_set // bytes_per_row)
        # Keep at least 2 grid tiles whenever B allows it so the "parallel"
        # grid axis lands work on both v7x TensorCores; costs only one extra
        # grid step on single-core v5e/v6e.
        rows_split = _round_up(-(-B // 2), 8)
        tb = min(rows_vmem, rows_split)
    tb = int(max(8, (int(tb) // 8) * 8))

    # Ragged last block is handled in-kernel (row mask). No jnp.pad: padding
    # would add a full extra HBM read+write pass over all three (B, D) inputs
    # in front of a purely bandwidth-bound kernel.
    num_tiles = -(-B // tb)

    kernel = functools.partial(_nca_hn_loss_kernel, batch=B)

    partials = pl.pallas_call(
        kernel,
        out_shape=jax.ShapeDtypeStruct((num_tiles, 8, 128), jnp.float32),
        grid_spec=pltpu.PrefetchScalarGridSpec(
            num_scalar_prefetch=0,
            grid=(num_tiles,),
            in_specs=[
                pl.BlockSpec((tb, D), lambda i: (i, 0)),
                pl.BlockSpec((tb, D), lambda i: (i, 0)),
                pl.BlockSpec((tb, D), lambda i: (i, 0)),
            ],
            # TODO(synk): if xprof shows exposed DMA between steps on v7x, try
            # pipeline_mode=pl.Buffered(3) on the three input BlockSpecs.
            out_specs=pl.BlockSpec((1, 8, 128), lambda i: (i, 0, 0)),
        ),
        compiler_params=pltpu.CompilerParams(
            # No cross-step accumulator -> the batch-tile axis is truly
            # parallel (megacore sharding on v7x).
            dimension_semantics=("parallel",),
            vmem_limit_bytes=vmem_limit,
        ),
    )(a_embed, p_embed, n_embed)

    # Tiny cross-tile reduction outside the kernel.
    return jnp.sum(partials[:, 0, 0])


def _reference(a, p, n):
    """Pure-JAX reference matching the PyTorch module."""
    def cos(x, y):
        num = jnp.sum(x * y, axis=1)
        den = jnp.maximum(
            jnp.linalg.norm(x, axis=1) * jnp.linalg.norm(y, axis=1), _EPS)
        return num / den

    p_cos = cos(a, p)
    n_cos = cos(a, n)
    normal = -jnp.log(jnp.exp(p_cos) / (jnp.exp(p_cos) + jnp.exp(n_cos)))
    return jnp.sum(jnp.where(n_cos > p_cos, n_cos, normal))


if __name__ == "__main__":
    key = jax.random.PRNGKey(0)

    # Case 1: small batch, auto tile -> 2 ragged tiles (8 + 2 masked rows).
    # Case 2: forced small tile -> 3-tile "parallel" grid, ragged last tile.
    # Case 3: larger batch + D=256, auto tile -> 2 tiles via the >=2-split rule.
    for (B, D, tb) in [(10, 128, None), (40, 128, 16), (300, 256, None)]:
        ka, kp, kn = jax.random.split(jax.random.fold_in(key, B), 3)
        a = jax.random.normal(ka, (B, D), dtype=jnp.float32)
        p = jax.random.normal(kp, (B, D), dtype=jnp.float32)
        n = jax.random.normal(kn, (B, D), dtype=jnp.float32)

        loss = jax.block_until_ready(nca_hn_loss(a, p, n, tb=tb))
        ref = jax.block_until_ready(_reference(a, p, n))
        assert jnp.allclose(loss, ref, rtol=1e-5, atol=1e-4), (B, D, tb, loss, ref)

    print("KERNEL_OK")
</pallas_src>

<mosaic_0001>
module attributes {stable_mosaic.version = 11 : i64} {
  func.func @_nca_hn_loss_kernel(%arg0: i32, %arg1: memref<8x128xf32, #tpu.memory_space<vmem>>, %arg2: memref<8x128xf32, #tpu.memory_space<vmem>>, %arg3: memref<8x128xf32, #tpu.memory_space<vmem>>, %arg4: memref<1x8x128xf32, #tpu.memory_space<vmem>>) attributes {dimension_semantics = [#tpu.dimension_semantics<parallel>], iteration_bounds = array<i64: 2>, scalar_prefetch = 0 : i64, scratch_operands = 0 : i64, tpu.core_type = #tpu.core_type<tc>, window_params = [{transform_indices = @transform_0, window_bounds = array<i64: 8, 128>}, {transform_indices = @transform_1, window_bounds = array<i64: 8, 128>}, {transform_indices = @transform_2, window_bounds = array<i64: 8, 128>}, {transform_indices = @transform_3, window_bounds = array<i64: 1, 8, 128>}]} {
    %c0 = arith.constant 0 : index
    %c0_0 = arith.constant 0 : index
    %0 = vector.load %arg1[%c0, %c0_0] : memref<8x128xf32, #tpu.memory_space<vmem>>, vector<8x128xf32>
    %c0_1 = arith.constant 0 : index
    %c0_2 = arith.constant 0 : index
    %1 = vector.load %arg2[%c0_1, %c0_2] : memref<8x128xf32, #tpu.memory_space<vmem>>, vector<8x128xf32>
    %2 = arith.mulf %0, %1 : vector<8x128xf32>
    %cst = arith.constant dense<0.000000e+00> : vector<8xf32>
    %3 = vector.multi_reduction <add>, %2, %cst [1] : vector<8x128xf32> to vector<8xf32>
    %4 = vector.shape_cast %3 : vector<8xf32> to vector<8x1xf32>
    %c0_3 = arith.constant 0 : index
    %c0_4 = arith.constant 0 : index
    %5 = vector.load %arg1[%c0_3, %c0_4] : memref<8x128xf32, #tpu.memory_space<vmem>>, vector<8x128xf32>
    %c0_5 = arith.constant 0 : index
    %c0_6 = arith.constant 0 : index
    %6 = vector.load %arg3[%c0_5, %c0_6] : memref<8x128xf32, #tpu.memory_space<vmem>>, vector<8x128xf32>
    %7 = arith.mulf %5, %6 : vector<8x128xf32>
    %cst_7 = arith.constant dense<0.000000e+00> : vector<8xf32>
    %8 = vector.multi_reduction <add>, %7, %cst_7 [1] : vector<8x128xf32> to vector<8xf32>
    %9 = vector.shape_cast %8 : vector<8xf32> to vector<8x1xf32>
    %c0_8 = arith.constant 0 : index
    %c0_9 = arith.constant 0 : index
    %10 = vector.load %arg1[%c0_8, %c0_9] : memref<8x128xf32, #tpu.memory_space<vmem>>, vector<8x128xf32>
    %c0_10 = arith.constant 0 : index
    %c0_11 = arith.constant 0 : index
    %11 = vector.load %arg1[%c0_10, %c0_11] : memref<8x128xf32, #tpu.memory_space<vmem>>, vector<8x128xf32>
    %12 = arith.mulf %10, %11 : vector<8x128xf32>
    %cst_12 = arith.constant dense<0.000000e+00> : vector<8xf32>
    %13 = vector.multi_reduction <add>, %12, %cst_12 [1] : vector<8x128xf32> to vector<8xf32>
    %14 = vector.shape_cast %13 : vector<8xf32> to vector<8x1xf32>
    %c0_13 = arith.constant 0 : index
    %c0_14 = arith.constant 0 : index
    %15 = vector.load %arg2[%c0_13, %c0_14] : memref<8x128xf32, #tpu.memory_space<vmem>>, vector<8x128xf32>
    %c0_15 = arith.constant 0 : index
    %c0_16 = arith.constant 0 : index
    %16 = vector.load %arg2[%c0_15, %c0_16] : memref<8x128xf32, #tpu.memory_space<vmem>>, vector<8x128xf32>
    %17 = arith.mulf %15, %16 : vector<8x128xf32>
    %cst_17 = arith.constant dense<0.000000e+00> : vector<8xf32>
    %18 = vector.multi_reduction <add>, %17, %cst_17 [1] : vector<8x128xf32> to vector<8xf32>
    %19 = vector.shape_cast %18 : vector<8xf32> to vector<8x1xf32>
    %c0_18 = arith.constant 0 : index
    %c0_19 = arith.constant 0 : index
    %20 = vector.load %arg3[%c0_18, %c0_19] : memref<8x128xf32, #tpu.memory_space<vmem>>, vector<8x128xf32>
    %c0_20 = arith.constant 0 : index
    %c0_21 = arith.constant 0 : index
    %21 = vector.load %arg3[%c0_20, %c0_21] : memref<8x128xf32, #tpu.memory_space<vmem>>, vector<8x128xf32>
    %22 = arith.mulf %20, %21 : vector<8x128xf32>
    %cst_22 = arith.constant dense<0.000000e+00> : vector<8xf32>
    %23 = vector.multi_reduction <add>, %22, %cst_22 [1] : vector<8x128xf32> to vector<8xf32>
    %24 = vector.shape_cast %23 : vector<8xf32> to vector<8x1xf32>
    %25 = arith.mulf %14, %19 : vector<8x1xf32>
    %cst_23 = arith.constant 1.000000e-16 : f32
    %26 = vector.broadcast %cst_23 : f32 to vector<8x1xf32>
    %27 = arith.maximumf %25, %26 : vector<8x1xf32>
    %28 = math.rsqrt %27 : vector<8x1xf32>
    %29 = arith.mulf %4, %28 : vector<8x1xf32>
    %30 = arith.mulf %14, %24 : vector<8x1xf32>
    %cst_24 = arith.constant 1.000000e-16 : f32
    %31 = vector.broadcast %cst_24 : f32 to vector<8x1xf32>
    %32 = arith.maximumf %30, %31 : vector<8x1xf32>
    %33 = math.rsqrt %32 : vector<8x1xf32>
    %34 = arith.mulf %9, %33 : vector<8x1xf32>
    %35 = arith.subf %34, %29 : vector<8x1xf32>
    %36 = math.exp %35 : vector<8x1xf32>
    %37 = math.log1p %36 : vector<8x1xf32>
    %38 = arith.cmpf ogt, %34, %29 : vector<8x1xf32>
    %39 = arith.select %38, %34, %37 : vector<8x1xi1>, vector<8x1xf32>
    %40 = tpu.iota {dimensions = array<i32: 0>} : vector<8x1xi32>
    %c8_i32 = arith.constant 8 : i32
    %41 = arith.muli %arg0, %c8_i32 : i32
    %42 = vector.broadcast %41 : i32 to vector<8x1xi32>
    %43 = arith.addi %42, %40 : vector<8x1xi32>
    %c10_i32 = arith.constant 10 : i32
    %44 = vector.broadcast %c10_i32 : i32 to vector<8x1xi32>
    %45 = arith.cmpi slt, %43, %44 : vector<8x1xi32>
    %cst_25 = arith.constant 0.000000e+00 : f32
    %46 = vector.broadcast %cst_25 : f32 to vector<8x1xf32>
    %47 = arith.select %45, %39, %46 : vector<8x1xi1>, vector<8x1xf32>
    %48 = vector.shape_cast %47 : vector<8x1xf32> to vector<1x8x1xf32>
    %cst_26 = arith.constant dense<0.000000e+00> : vector<1xf32>
    %49 = vector.multi_reduction <add>, %48, %cst_26 [1, 2] : vector<1x8x1xf32> to vector<1xf32>
    %50 = vector.shape_cast %49 : vector<1xf32> to vector<1x1x1xf32>
    %51 = vector.extract %50[0, 0, 0] : f32 from vector<1x1x1xf32>
    %52 = vector.broadcast %51 : f32 to vector<1x8x128xf32>
    %c0_27 = arith.constant 0 : index
    %c0_28 = arith.constant 0 : index
    %c0_29 = arith.constant 0 : index
    %53 = vector.load %arg4[%c0_27, %c0_28, %c0_29] : memref<1x8x128xf32, #tpu.memory_space<vmem>>, vector<1x8x128xf32>
    tpu.vector_store %arg4[%c0_27, %c0_28, %c0_29], %52 {strides = array<i32>} : memref<1x8x128xf32, #tpu.memory_space<vmem>>, vector<1x8x128xf32>,
    return
  }
  func.func @transform_0(%arg0: i32) -> (i32, i32) {
    %c0_i32 = arith.constant 0 : i32
    %c0_i32_0 = arith.constant 0 : i32
    return %arg0, %c0_i32 : i32, i32
  }
  func.func @transform_1(%arg0: i32) -> (i32, i32) {
    %c0_i32 = arith.constant 0 : i32
    %c0_i32_0 = arith.constant 0 : i32
    return %arg0, %c0_i32 : i32, i32
  }
  func.func @transform_2(%arg0: i32) -> (i32, i32) {
    %c0_i32 = arith.constant 0 : i32
    %c0_i32_0 = arith.constant 0 : i32
    return %arg0, %c0_i32 : i32, i32
  }
  func.func @transform_3(%arg0: i32) -> (i32, i32, i32) {
    %c0_i32 = arith.constant 0 : i32
    %c0_i32_0 = arith.constant 0 : i32
    %c0_i32_1 = arith.constant 0 : i32
    return %arg0, %c0_i32, %c0_i32_0 : i32, i32, i32
  }
}

</mosaic_0001>

<llo_original>
// kernel: tpu_custom_call.1
$region0: #{tpu_custom_call.1}
  #allocation0 [shape = 'u32[]', space=smem, size = 0x4, offset = 0x4, fixed_abs, tag = 'smem constant byte address 0x4 - core index']
  #allocation1 [shape = 'u32[144,128]{1,0:T(1,128)}', space=vmem, size = 0x12000, scoped, tag = 'internal scratch']
  %s0 = inlined_call_operand.hbm [shape: f32[10,128], index: 0, kind: input, shape index: {}]
  %s1 = inlined_call_operand.hbm [shape: f32[10,128], index: 1, kind: input, shape index: {}]
  %s2 = inlined_call_operand.hbm [shape: f32[10,128], index: 2, kind: input, shape index: {}]
  %s3 = inlined_call_operand.hbm [shape: f32[2,8,128], index: 3, kind: output, shape index: {}]
  %s4 = sld [smem:[#allocation0]]
  $region57: #{tpu_custom_call.1} parent=0
    _
  %s6 = ssub.s32 1, %s4
  %s7 = scalar_select 0, %s6, %s4
  $region1: #{tpu_custom_call.1} parent=0
    #allocation2 [shape = 'u8[8192]{0}', space=vmem, size = 0x2000, scoped, tag = 'input window, operand 0']
    #allocation3 [shape = 's32[2]{0}', space=sflag, size = 0x8, scoped, tag = 'scoped memory for tpu_custom_call.1']
    #allocation4 [shape = 's32[2]{0}', space=sflag, size = 0x8, scoped, tag = 'scoped memory for tpu_custom_call.1']
    #allocation5 [shape = 'u8[8192]{0}', space=vmem, size = 0x2000, scoped, tag = 'input window, operand 1']
    #allocation6 [shape = 's32[2]{0}', space=sflag, size = 0x8, scoped, tag = 'scoped memory for tpu_custom_call.1']
    #allocation7 [shape = 'u8[8192]{0}', space=vmem, size = 0x2000, scoped, tag = 'input window, operand 2']
    #allocation8 [shape = 'u8[8192]{0}', space=vmem, size = 0x2000, scoped, tag = 'output window, operand 0']
    %8 = vsyncpa [#allocation3], 0
    %s9 = scalar_lea.sflag [#allocation3], 1
    %10 = vsyncpa %s9, 0
    %11 = vsyncpa [#allocation6], 0
    %s12 = scalar_lea.sflag [#allocation6], 1
    %13 = vsyncpa %s12, 0
    %14 = vsyncpa [#allocation4], 0
    %s15 = scalar_lea.sflag [#allocation4], 1
    %16 = vsyncpa %s15, 0
    loop: start=0, step=1, limit=4
    $region2: #{tpu_custom_call.1} parent=1 // loop_pre_header
      _
    $region3: #{tpu_custom_call.1} parent=1 // loop_header
      %s18 = sphi 0, %s22
      %p19 = scmp.ge.s32.totalorder %s18, 4
      %s28 = sphi 0, %s30
      %s31 = sphi 0, %s28
      %s32 = sphi 0, %s31
      %s48 = sphi 0, %s32
      %s54 = sphi 0, %s56
      %s57 = sphi 0, %s54
      %s58 = sphi 0, %s57
      %s74 = sphi 0, %s58
      %s80 = sphi 0, %s82
      %s83 = sphi 0, %s80
      %s84 = sphi 0, %s83
      %s100 = sphi 0, %s84
      %s106 = sphi 0, %s108
      %s109 = sphi 0, %s106
      %s110 = sphi 0, %s109
      %s126 = sphi 0, %s110
    $region4: #{tpu_custom_call.1} parent=1 // loop_header_branch
      %21 = sbr.rel (%p19) target = $region8
    $region5: #{tpu_custom_call.1} parent=1 // loop_body
      %s23 = ssub.s32 %s18, 1
      %s24 = ssub.s32 %s18, 2
      %s25 = sadd.s32 %s18, 1
      %s26 = ssub.s32 %s18, %s25
      %p27 = scmp.eq.s32.totalorder %s26, 0
      %s29 = sadd.s32 %s28, 1
      %s30 = scalar_select %p27, %s28, %s29
      %p33 = pneg %p27
      %p34 = scmp.eq.s32.totalorder %s18, 1
      %p35 = por %p33, %p34
      %p36 = scmp.ne.s32.totalorder %s28, %s31
      %p37 = scmp.eq.s32.totalorder %s18, 0
      %p38 = por %p36, %p37
      %p39 = scmp.ne.s32.totalorder %s28, %s31
      %p40 = scmp.eq.s32.totalorder %s23, 1
      %p41 = por %p39, %p40
      %p42 = scmp.ne.s32.totalorder %s31, %s32
      %p43 = scmp.eq.s32.totalorder %s23, 0
      %p44 = por %p42, %p43
      %p45 = scmp.ne.s32.totalorder %s31, %s32
      %p46 = scmp.eq.s32.totalorder %s24, 1
      %p47 = por %p45, %p46
      %p49 = scmp.ne.s32.totalorder %s32, %s48
      %p50 = scmp.eq.s32.totalorder %s24, 0
      %p51 = por %p49, %p50
      %s52 = ssub.s32 %s18, %s25
      %p53 = scmp.eq.s32.totalorder %s52, 0
      %s55 = sadd.s32 %s54, 1
      %s56 = scalar_select %p53, %s54, %s55
      %p59 = pneg %p53
      %p60 = scmp.eq.s32.totalorder %s18, 1
      %p61 = por %p59, %p60
      %p62 = scmp.ne.s32.totalorder %s54, %s57
      %p63 = scmp.eq.s32.totalorder %s18, 0
      %p64 = por %p62, %p63
      %p65 = scmp.ne.s32.totalorder %s54, %s57
      %p66 = scmp.eq.s32.totalorder %s23, 1
      %p67 = por %p65, %p66
      %p68 = scmp.ne.s32.totalorder %s57, %s58
      %p69 = scmp.eq.s32.totalorder %s23, 0
      %p70 = por %p68, %p69
      %p71 = scmp.ne.s32.totalorder %s57, %s58
      %p72 = scmp.eq.s32.totalorder %s24, 1
      %p73 = por %p71, %p72
      %p75 = scmp.ne.s32.totalorder %s58, %s74
      %p76 = scmp.eq.s32.totalorder %s24, 0
      %p77 = por %p75, %p76
      %s78 = ssub.s32 %s18, %s25
      %p79 = scmp.eq.s32.totalorder %s78, 0
      %s81 = sadd.s32 %s80, 1
      %s82 = scalar_select %p79, %s80, %s81
      %p85 = pneg %p79
      %p86 = scmp.eq.s32.totalorder %s18, 1
      %p87 = por %p85, %p86
      %p88 = scmp.ne.s32.totalorder %s80, %s83
      %p89 = scmp.eq.s32.totalorder %s18, 0
      %p90 = por %p88, %p89
      %p91 = scmp.ne.s32.totalorder %s80, %s83
      %p92 = scmp.eq.s32.totalorder %s23, 1
      %p93 = por %p91, %p92
      %p94 = scmp.ne.s32.totalorder %s83, %s84
      %p95 = scmp.eq.s32.totalorder %s23, 0
      %p96 = por %p94, %p95
      %p97 = scmp.ne.s32.totalorder %s83, %s84
      %p98 = scmp.eq.s32.totalorder %s24, 1
      %p99 = por %p97, %p98
      %p101 = scmp.ne.s32.totalorder %s84, %s100
      %p102 = scmp.eq.s32.totalorder %s24, 0
      %p103 = por %p101, %p102
      %s104 = ssub.s32 %s18, %s25
      %p105 = scmp.eq.s32.totalorder %s104, 0
      %s107 = sadd.s32 %s106, 1
      %s108 = scalar_select %p105, %s106, %s107
      %p111 = pneg %p105
      %p112 = scmp.eq.s32.totalorder %s18, 1
      %p113 = por %p111, %p112
      %p114 = scmp.ne.s32.totalorder %s106, %s109
      %p115 = scmp.eq.s32.totalorder %s18, 0
      %p116 = por %p114, %p115
      %p117 = scmp.ne.s32.totalorder %s106, %s109
      %p118 = scmp.eq.s32.totalorder %s23, 1
      %p119 = por %p117, %p118
      %p120 = scmp.ne.s32.totalorder %s109, %s110
      %p121 = scmp.eq.s32.totalorder %s23, 0
      %p122 = por %p120, %p121
      %p123 = scmp.ne.s32.totalorder %s109, %s110
      %p124 = scmp.eq.s32.totalorder %s24, 1
      %p125 = por %p123, %p124
      %p127 = scmp.ne.s32.totalorder %s110, %s126
      %p128 = scmp.eq.s32.totalorder %s24, 0
      %p129 = por %p127, %p128
      %p130 = scmp.le.s32.totalorder 1, %s18
      %p131 = scmp.lt.s32.totalorder %s18, 3
      %p132 = pnand %p130, %p131
      %p133 = pneg %p132
      // Predicated region
      $region9: #{tpu_custom_call.1} parent=5 // pred_check
        _
      $region10: #{tpu_custom_call.1} parent=5 // pred_check_branch
        %135 = sbr.rel (%p132) target = $region12
      $region11: #{tpu_custom_call.1} parent=5 // pred_region
        %s136 = ssub.s32 %s18, 1
      $region12: #{tpu_custom_call.1} parent=5 // pred_fallthru
        _
      %p137 = scmp.lt.s32.totalorder %s18, 2
      // Predicated region
      $region13: #{tpu_custom_call.1} parent=5 // pred_check
        %p138 = pneg %p137
      $region14: #{tpu_custom_call.1} parent=5 // pred_check_branch
        %140 = sbr.rel (%p138) target = $region16
      $region15: #{tpu_custom_call.1} parent=5 // pred_region
        // Predicated region
        $region17: #{tpu_custom_call.1} parent=15 // pred_check
          %p141 = pneg %p38
        $region18: #{tpu_custom_call.1} parent=15 // pred_check_branch
          %143 = sbr.rel (%p141) target = $region20
        $region19: #{tpu_custom_call.1} parent=15 // pred_region
          %s144 = sand.u32 %s28, 1
          %s145 = scalar_lea.sflag [#allocation3], %s144
          %s146 = sand.u32 %s28, 1
          %s147 = smul.addr %s146, 8
          %s148 = scalar_lea.vmem [#allocation2], %s147
          %s150 = ssub.s32 128, 128
          %151 = vsyncadd %s145, %s150
          %s152 = smul.addr %s18, 128
          %s153 = scalar_lea.hbm %s0, %s152
          %s155 = sshll.u32 %s148, 4
          %s156 = int_to_ptr.vmem [resolvable:$true] %s155
          %158 = dma.hbm_to_vmem [thread:$0]  %s153, 128, %s156, %s145
        $region20: #{tpu_custom_call.1} parent=15 // pred_fallthru
          _
        // Predicated region
        $region21: #{tpu_custom_call.1} parent=15 // pred_check
          %p159 = pneg %p64
        $region22: #{tpu_custom_call.1} parent=15 // pred_check_branch
          %161 = sbr.rel (%p159) target = $region24
        $region23: #{tpu_custom_call.1} parent=15 // pred_region
          %s162 = sand.u32 %s18, 1
          %s163 = scalar_lea.sflag [#allocation6], %s162
          %s164 = sand.u32 %s54, 1
          %s165 = smul.addr %s164, 8
          %s166 = scalar_lea.vmem [#allocation5], %s165
          %s168 = ssub.s32 128, 128
          %169 = vsyncadd %s163, %s168
          %s170 = smul.addr %s18, 128
          %s171 = scalar_lea.hbm %s1, %s170
          %s173 = sshll.u32 %s166, 4
          %s174 = int_to_ptr.vmem [resolvable:$true] %s173
          %176 = dma.hbm_to_vmem [thread:$0]  %s171, 128, %s174, %s163
        $region24: #{tpu_custom_call.1} parent=15 // pred_fallthru
          _
        // Predicated region
        $region25: #{tpu_custom_call.1} parent=15 // pred_check
          %p177 = pneg %p90
        $region26: #{tpu_custom_call.1} parent=15 // pred_check_branch
          %179 = sbr.rel (%p177) target = $region28
        $region27: #{tpu_custom_call.1} parent=15 // pred_region
          %s180 = sand.u32 %s18, 1
          %s181 = scalar_lea.sflag [#allocation6], %s180
          %s182 = sand.u32 %s80, 1
          %s183 = smul.addr %s182, 8
          %s184 = scalar_lea.vmem [#allocation7], %s183
          %s186 = ssub.s32 128, 128
          %187 = vsyncadd %s181, %s186
          %s188 = smul.addr %s18, 128
          %s189 = scalar_lea.hbm %s2, %s188
          %s191 = sshll.u32 %s184, 4
          %s192 = int_to_ptr.vmem [resolvable:$true] %s191
          %194 = dma.hbm_to_vmem [thread:$0]  %s189, 128, %s192, %s181
        $region28: #{tpu_custom_call.1} parent=15 // pred_fallthru
          _
      $region16: #{tpu_custom_call.1} parent=5 // pred_fallthru
        _
      %p195 = scmp.le.s32.totalorder 1, %s18
      %p196 = scmp.lt.s32.totalorder %s18, 3
      %p197 = pnand %p195, %p196
      %p198 = pneg %p197
      // Predicated region
      $region29: #{tpu_custom_call.1} parent=5 // pred_check
        _
      $region30: #{tpu_custom_call.1} parent=5 // pred_check_branch
        %200 = sbr.rel (%p197) target = $region32
      $region31: #{tpu_custom_call.1} parent=5 // pred_region
        %s201 = ssub.s32 %s18, 1
        %s202 = sand.u32 %s31, 1
        %s203 = scalar_lea.sflag [#allocation3], %s202
        %s204 = sand.u32 %s31, 1
        %s205 = smul.addr %s204, 8
        %s206 = scalar_lea.vmem [#allocation2], %s205
        // Predicated region
        $region33: #{tpu_custom_call.1} parent=31 // pred_check
          %p207 = pneg %p44
        $region34: #{tpu_custom_call.1} parent=31 // pred_check_branch
          %209 = sbr.rel (%p207) target = $region36
        $region35: #{tpu_custom_call.1} parent=31 // pred_region
          %210 = dma.done %s203, 128
        $region36: #{tpu_custom_call.1} parent=31 // pred_fallthru
          _
        %s211 = sand.u32 %s23, 1
        %s212 = scalar_lea.sflag [#allocation6], %s211
        %s213 = sand.u32 %s57, 1
        %s214 = smul.addr %s213, 8
        %s215 = scalar_lea.vmem [#allocation5], %s214
        // Predicated region
        $region37: #{tpu_custom_call.1} parent=31 // pred_check
          %p216 = pneg %p70
        $region38: #{tpu_custom_call.1} parent=31 // pred_check_branch
          %218 = sbr.rel (%p216) target = $region40
        $region39: #{tpu_custom_call.1} parent=31 // pred_region
          %219 = dma.done %s212, 128
        $region40: #{tpu_custom_call.1} parent=31 // pred_fallthru
          _
        %s220 = sand.u32 %s23, 1
        %s221 = scalar_lea.sflag [#allocation6], %s220
        %s222 = sand.u32 %s83, 1
        %s223 = smul.addr %s222, 8
        %s224 = scalar_lea.vmem [#allocation7], %s223
        // Predicated region
        $region41: #{tpu_custom_call.1} parent=31 // pred_check
          %p225 = pneg %p96
        $region42: #{tpu_custom_call.1} parent=31 // pred_check_branch
          %227 = sbr.rel (%p225) target = $region44
        $region43: #{tpu_custom_call.1} parent=31 // pred_region
          %228 = dma.done %s221, 128
        $region44: #{tpu_custom_call.1} parent=31 // pred_fallthru
          _
        %s229 = sand.u32 %s31, 1
        %s230 = scalar_lea.sflag [#allocation3], %s229
        %s231 = sand.u32 %s31, 1
        %s232 = smul.addr %s231, 8
        %s233 = scalar_lea.vmem [#allocation2], %s232
        %p234 = pneg %p44
        %p235 = pneg %p41
        %s236 = sand.u32 %s23, 1
        %s237 = scalar_lea.sflag [#allocation6], %s236
        %s238 = sand.u32 %s57, 1
        %s239 = smul.addr %s238, 8
        %s240 = scalar_lea.vmem [#allocation5], %s239
        %p241 = pneg %p70
        %p242 = pneg %p67
        %s243 = sand.u32 %s23, 1
        %s244 = scalar_lea.sflag [#allocation6], %s243
        %s245 = sand.u32 %s83, 1
        %s246 = smul.addr %s245, 8
        %s247 = scalar_lea.vmem [#allocation7], %s246
        %p248 = pneg %p96
        %p249 = pneg %p93
        %p250 = pneg %p122
        %p251 = pneg %p119
        %s252 = sand.u32 %s109, 1
        %s253 = scalar_lea.sflag [#allocation4], %s252
        %s254 = sand.u32 %s109, 1
        %s255 = smul.addr %s254, 8
        %s256 = scalar_lea.vmem [#allocation8], %s255
        %v257 = vld [vmem:[%s206] sm:$0xff]
        %v258 = vld [vmem:[%s215] sm:$0xff]
        %v259 = vmul.f32 %v257, %v258
        %260 = vadd.xlane.f32.xlu0 %v259
        %v261 = vpop.xlane.xlu0 %260
        %v262 = vld [vmem:[%s224] sm:$0xff]
        %v263 = vmul.f32 %v257, %v262
        %264 = vadd.xlane.f32.xlu0 %v263
        %v265 = vpop.xlane.xlu0 %264
        %v266 = vmul.f32 %v257, %v257
        %267 = vadd.xlane.f32.xlu0 %v266
        %v268 = vpop.xlane.xlu0 %267
        %v269 = vmul.f32 %v258, %v258
        %270 = vadd.xlane.f32.xlu0 %v269
        %v271 = vpop.xlane.xlu0 %270
        %v272 = vmul.f32 %v262, %v262
        %273 = vadd.xlane.f32.xlu0 %v272
        %v274 = vpop.xlane.xlu0 %273
        %v275 = vmul.f32 %v268, %v271
        %v276 = vmax.f32 %v275, 1e-16
        %v277 = vrsqrt.pop %v276
        %v278 = vmul.f32 %v261, %v277
        %v279 = vmul.f32 %v268, %v274
        %v280 = vmax.f32 %v279, 1e-16
        %v281 = vrsqrt.pop %v280
        %v282 = vmul.f32 %v265, %v281
        %v283 = vsub.f32 %v282, %v278
        %v284 = vmul.f32 %v283, 1.442695
        %v285 = vpow.pop %v284
        %v286 = vadd.f32 %v285, 1.0
        %v287 = vlog2.pop %v286
        %v288 = vmul.f32 %v287, 0.6931472
        %v289 = vmul.f32 -0.5, %v285
        %v290 = vadd.f32 %v289, 1.0
        %v291 = vmul.f32 %v290, %v285
        %v292 = vand.u32 2147483647, %v285
        %vm293 = vcmp.lt.f32.partialorder %v292, 0.0004427343
        %v294 = vsel %vm293, %v291, %v288
        %vm295 = vcmp.gt.f32.partialorder %v282, %v278
        %v296 = vsel %vm295, %v282, %v294
        %v297 = vlaneseq
        %v298 = vshrl.u32 %v297, 7
        %s299 = smul.u32 %s23, 8
        %v300 = vstv %s299
        %v301 = vadd.s32 %v300, %v298
        %vm302 = vcmp.lt.s32.totalorder %v301, 10
        %v303 = vsel %vm302, %v296, 0.0
        %vm304 = vcmask 7168
        %v305 = vsel %vm304, %v303, 0.0
        %306 = vadd.xlane.f32.xlu0 %v305
        %v307 = vpop.xlane.xlu0 %306
        %v308 = vrot.slane %v307, 4
        %v309 = vadd.f32 %v307, %v308
        %v310 = vrot.slane %v309, 2
        %v311 = vadd.f32 %v309, %v310
        %v312 = vrot.slane %v311, 1
        %v313 = vadd.f32 %v311, %v312
        %s314 = vtos %v313
        %v315 = vstv %s314
        %316 = vst [vmem:[%s256] sm:$0xff] %v315
        %s317 = sand.u32 %s109, 1
        %s318 = scalar_lea.sflag [#allocation4], %s317
        %s319 = sand.u32 %s109, 1
        %s320 = smul.addr %s319, 8
        %s321 = scalar_lea.vmem [#allocation8], %s320
        // Predicated region
        $region45: #{tpu_custom_call.1} parent=31 // pred_check
          %p322 = pneg %p119
        $region46: #{tpu_custom_call.1} parent=31 // pred_check_branch
          %324 = sbr.rel (%p322) target = $region48
        $region47: #{tpu_custom_call.1} parent=31 // pred_region
          %s326 = ssub.s32 128, 128
          %327 = vsyncadd %s318, %s326
          %s328 = smul.addr %s23, 128
          %s329 = scalar_lea.hbm %s3, %s328
          %s331 = sshll.u32 %s321, 4
          %s332 = int_to_ptr.vmem [resolvable:$true] %s331
          %334 = dma.vmem_to_hbm [thread:$0]  %s332, 128, %s329, %s318
        $region48: #{tpu_custom_call.1} parent=31 // pred_fallthru
          _
      $region32: #{tpu_custom_call.1} parent=5 // pred_fallthru
        _
      %p335 = scmp.le.s32.totalorder 2, %s18
      // Predicated region
      $region49: #{tpu_custom_call.1} parent=5 // pred_check
        %p336 = pneg %p335
      $region50: #{tpu_custom_call.1} parent=5 // pred_check_branch
        %338 = sbr.rel (%p336) target = $region52
      $region51: #{tpu_custom_call.1} parent=5 // pred_region
        %s339 = ssub.s32 %s18, 2
        // Predicated region
        $region53: #{tpu_custom_call.1} parent=51 // pred_check
          %p340 = pneg %p125
        $region54: #{tpu_custom_call.1} parent=51 // pred_check_branch
          %342 = sbr.rel (%p340) target = $region56
        $region55: #{tpu_custom_call.1} parent=51 // pred_region
          %s343 = sand.u32 %s110, 1
          %s344 = scalar_lea.sflag [#allocation4], %s343
          %s345 = sand.u32 %s110, 1
          %s346 = smul.addr %s345, 8
          %s347 = scalar_lea.vmem [#allocation8], %s346
          %348 = dma.done %s344, 128
        $region56: #{tpu_custom_call.1} parent=51 // pred_fallthru
          _
      $region52: #{tpu_custom_call.1} parent=5 // pred_fallthru
        _
    $region6: #{tpu_custom_call.1} parent=1 // loop_footer
      %s22 = sadd.s32 1, %s18
    $region7: #{tpu_custom_call.1} parent=1 // loop_footer_branch
      %17 = sbr.rel target = $region3
    $region8: #{tpu_custom_call.1} parent=1 // loop_exit
      _
    %349 = vsyncpa [#allocation3], 1
    %s350 = scalar_lea.sflag [#allocation3], 1
    %351 = vsyncpa %s350, 1
    %352 = vsyncpa [#allocation6], 1
    %s353 = scalar_lea.sflag [#allocation6], 1
    %354 = vsyncpa %s353, 1
    %355 = vsyncpa [#allocation4], 1
    %s356 = scalar_lea.sflag [#allocation4], 1
    %357 = vsyncpa %s356, 1

</llo_original>
